<compile_context>
chip_gen: v7x
topology: tpu7x:2x2x1
jax: 0.10.0
libtpu: 0.0.40
codegen_flags: <defaults>
</compile_context>

<pallas_src>
import functools

import jax
import jax.numpy as jnp
from jax.experimental import pallas as pl
from jax.experimental.pallas import tpu as pltpu


def _ls_ce_kernel(pred_ref, tgt_ref, out_ref, *, smoothing, num_classes):
    """One row tile -> (loss_sum, valid_count) partial for this tile."""
    x = pred_ref[...].astype(jnp.float32)          # (tile_n, c_pad), f32 math
    t = tgt_ref[...]                               # (tile_n, 1) int32

    c_pad = x.shape[-1]
    smooth_val = smoothing / (num_classes - 1)
    confidence = 1.0 - smoothing

    # Numerically-stable log-softmax pieces; logp is never materialized.
    m = jnp.max(x, axis=-1, keepdims=True)                        # (tile_n, 1)
    z = x - m                                                     # (tile_n, C)
    lse = jnp.log(jnp.sum(jnp.exp(z), axis=-1, keepdims=True))    # (tile_n, 1)

    # Fused weighted reduce: true_dist sums to 1 for valid rows, so
    #   -sum_c true_dist[c] * (z[c] - lse) = lse - sum_c w[c]*z[c]
    col = jax.lax.broadcasted_iota(jnp.int32, x.shape, 1)
    w = jnp.where(col == t, confidence, smooth_val)
    if c_pad != num_classes:
        # Host-padded class columns (logit = -1e9) get zero weight.
        w = jnp.where(col < num_classes, w, 0.0)
    wz = jnp.sum(w * z, axis=-1, keepdims=True)                   # (tile_n, 1)
    per_row = lse - wz

    valid = t != -100                                             # (tile_n, 1)
    loss_sum = jnp.sum(jnp.where(valid, per_row, 0.0))
    cnt = jnp.sum(valid.astype(jnp.float32))
    out_ref[...] = jnp.concatenate(
        [loss_sum.reshape(1, 1, 1), cnt.reshape(1, 1, 1)], axis=-1)


def _round_up(x, m):
    return ((x + m - 1) // m) * m


def label_smoothing_cross_entropy(pred, target, smoothing=0.1, tile_n=None):
    """pred: (N, C) float logits (f32 or bf16); target: (N,) int, -100 = ignore.

    Returns mean label-smoothing CE over rows with target != -100.
    (If every target is -100 the result is NaN, matching the PyTorch module.)
    """
    n, c = pred.shape
    itemsize = jnp.dtype(pred.dtype).itemsize
    sublane = max(8, 32 // itemsize)          # 8 for f32, 16 for bf16

    # Pad the class axis to a lane multiple host-side so every in-kernel
    # vector op / reduction runs on fully-populated vregs. Padded columns get
    # a big negative logit (exp -> 0) and zero weight inside the kernel.
    c_pad = _round_up(c, 128)
    if c_pad != c:
        pred = jnp.pad(pred, ((0, 0), (0, c_pad - c)), constant_values=-1e9)

    # Per-generation VMEM budget for one (tile_n, c_pad) pred block
    # (double-buffered by the Pallas pipeline) and the scoped-VMEM limit.
    try:
        vmem_cap = pltpu.get_tpu_info().vmem_capacity_bytes
    except Exception:  # pragma: no cover - be conservative if query fails
        vmem_cap = None
    if vmem_cap is not None and vmem_cap > 64 * 1024 * 1024:      # v5e / v6e
        budget_bytes, vmem_limit = 6 * 1024 * 1024, 100 * 1024 * 1024
    else:                                                          # v7x-class
        budget_bytes, vmem_limit = 2 * 1024 * 1024, 48 * 1024 * 1024

    n_rounded = _round_up(n, sublane)
    if tile_n is None:
        tile_n = min(budget_bytes // max(1, c_pad * itemsize), 1024)
        tile_n = max(sublane, (tile_n // sublane) * sublane)
        tile_n = min(tile_n, n_rounded)
        # Guarantee >=2 (ideally >=4) grid steps: keeps both v7x TensorCores
        # busy on the "parallel" axis and gives the DMA pipeline overlap.
        if n_rounded >= 4 * sublane:
            min_tiles = 4
        elif n_rounded >= 2 * sublane:
            min_tiles = 2
        else:
            min_tiles = 1
        if min_tiles > 1:
            cap = max(sublane, ((n_rounded // min_tiles) // sublane) * sublane)
            tile_n = min(tile_n, cap)
    else:
        tile_n = min(tile_n, n_rounded)
        tile_n = max(sublane, (tile_n // sublane) * sublane)

    n_pad = _round_up(n, tile_n)
    if n_pad != n:
        pred = jnp.pad(pred, ((0, n_pad - n), (0, 0)))
        target = jnp.pad(target, (0, n_pad - n), constant_values=-100)
    tgt2d = target.astype(jnp.int32).reshape(n_pad, 1)
    num_tiles = n_pad // tile_n

    kernel = functools.partial(
        _ls_ce_kernel, smoothing=float(smoothing), num_classes=c)

    parts = pl.pallas_call(
        kernel,
        out_shape=jax.ShapeDtypeStruct((num_tiles, 1, 2), jnp.float32),
        grid_spec=pltpu.PrefetchScalarGridSpec(
            num_scalar_prefetch=0,
            grid=(num_tiles,),
            in_specs=[
                pl.BlockSpec((tile_n, c_pad), lambda i: (i, 0)),
                pl.BlockSpec((tile_n, 1), lambda i: (i, 0)),
            ],
            out_specs=pl.BlockSpec((1, 1, 2), lambda i: (i, 0, 0)),
        ),
        compiler_params=pltpu.CompilerParams(
            dimension_semantics=("parallel",),
            vmem_limit_bytes=vmem_limit,
        ),
    )(pred, tgt2d)

    # Tiny final reduction + scalar division outside the hot path.
    loss_sum = jnp.sum(parts[:, 0, 0])
    valid_cnt = jnp.sum(parts[:, 0, 1])
    return loss_sum / valid_cnt


def _reference(pred, target, smoothing=0.1):
    """Pure-JAX reference mirroring the PyTorch forward."""
    pred = pred.astype(jnp.float32)
    logp = jax.nn.log_softmax(pred, axis=-1)
    c = pred.shape[-1]
    smooth_val = smoothing / (c - 1)
    confidence = 1.0 - smoothing
    safe_tgt = jnp.where(target == -100, 0, target)
    true_dist = jnp.full_like(logp, smooth_val)
    true_dist = true_dist.at[jnp.arange(pred.shape[0]), safe_tgt].set(confidence)
    mask = (target != -100)[:, None].astype(jnp.float32)
    loss = jnp.sum(-true_dist * logp * mask)
    return loss / jnp.sum(target != -100)


if __name__ == "__main__":
    key = jax.random.PRNGKey(0)
    k1, k2, k3, k4 = jax.random.split(key, 4)

    # 1) f32 logits, explicit tile; N not a multiple of the tile so the row
    #    pad/mask path and a multi-step grid are both exercised.
    N, C = 300, 256
    pred = jax.random.normal(k1, (N, C), dtype=jnp.float32)
    target = jax.random.randint(k2, (N,), 0, C, dtype=jnp.int32)
    target = target.at[3].set(-100).at[111].set(-100).at[N - 1].set(-100)
    loss = jax.block_until_ready(
        label_smoothing_cross_entropy(pred, target, smoothing=0.1, tile_n=128))
    ref = _reference(pred, target, smoothing=0.1)
    assert jnp.allclose(loss, ref, rtol=1e-5, atol=1e-5), (loss, ref)

    # 2) bf16 logits in HBM, auto-tiled path (>=2 grid steps guaranteed);
    #    softmax math stays f32 in-kernel.
    pred_bf16 = pred.astype(jnp.bfloat16)
    loss_bf16 = jax.block_until_ready(
        label_smoothing_cross_entropy(pred_bf16, target, smoothing=0.1))
    ref_bf16 = _reference(pred_bf16, target, smoothing=0.1)
    assert jnp.allclose(loss_bf16, ref_bf16, rtol=1e-4, atol=1e-4), (
        loss_bf16, ref_bf16)

    # 3) C not a multiple of 128: host-side class padding + in-kernel
    #    zero-weight masking of the padded columns.
    N2, C2 = 200, 300
    pred2 = jax.random.normal(k3, (N2, C2), dtype=jnp.float32)
    target2 = jax.random.randint(k4, (N2,), 0, C2, dtype=jnp.int32)
    target2 = target2.at[0].set(-100).at[77].set(-100)
    loss2 = jax.block_until_ready(
        label_smoothing_cross_entropy(pred2, target2, smoothing=0.1))
    ref2 = _reference(pred2, target2, smoothing=0.1)
    assert jnp.allclose(loss2, ref2, rtol=1e-5, atol=1e-5), (loss2, ref2)

    print("KERNEL_OK")
</pallas_src>

<mosaic_0001>
module attributes {stable_mosaic.version = 11 : i64} {
  func.func @_ls_ce_kernel(%arg0: i32, %arg1: memref<128x256xf32, #tpu.memory_space<vmem>>, %arg2: memref<128x1xi32, #tpu.memory_space<vmem>>, %arg3: memref<1x1x2xf32, #tpu.memory_space<vmem>>) attributes {dimension_semantics = [#tpu.dimension_semantics<parallel>], iteration_bounds = array<i64: 3>, scalar_prefetch = 0 : i64, scratch_operands = 0 : i64, tpu.core_type = #tpu.core_type<tc>, window_params = [{transform_indices = @transform_0, window_bounds = array<i64: 128, 256>}, {transform_indices = @transform_1, window_bounds = array<i64: 128, 1>}, {transform_indices = @transform_2, window_bounds = array<i64: 1, 1, 2>}]} {
    %c0 = arith.constant 0 : index
    %c0_0 = arith.constant 0 : index
    %0 = vector.load %arg1[%c0, %c0_0] : memref<128x256xf32, #tpu.memory_space<vmem>>, vector<128x256xf32>
    %c0_1 = arith.constant 0 : index
    %c0_2 = arith.constant 0 : index
    %1 = vector.load %arg2[%c0_1, %c0_2] : memref<128x1xi32, #tpu.memory_space<vmem>>, vector<128x1xi32>
    %cst = arith.constant dense<0xFF800000> : vector<128xf32>
    %2 = vector.multi_reduction <maximumf>, %0, %cst [1] : vector<128x256xf32> to vector<128xf32>
    %3 = vector.shape_cast %2 : vector<128xf32> to vector<128x1xf32>
    %4 = vector.broadcast %3 : vector<128x1xf32> to vector<128x256xf32>
    %5 = arith.subf %0, %4 : vector<128x256xf32>
    %6 = math.exp %5 : vector<128x256xf32>
    %cst_3 = arith.constant dense<0.000000e+00> : vector<128xf32>
    %7 = vector.multi_reduction <add>, %6, %cst_3 [1] : vector<128x256xf32> to vector<128xf32>
    %8 = vector.shape_cast %7 : vector<128xf32> to vector<128x1xf32>
    %9 = math.log %8 : vector<128x1xf32>
    %10 = tpu.iota {dimensions = array<i32: 1>} : vector<128x256xi32>
    %11 = vector.broadcast %1 : vector<128x1xi32> to vector<128x256xi32>
    %12 = arith.cmpi eq, %10, %11 : vector<128x256xi32>
    %cst_4 = arith.constant 0.899999976 : f32
    %cst_5 = arith.constant 3.92156857E-4 : f32
    %13 = vector.broadcast %cst_4 : f32 to vector<128x256xf32>
    %14 = vector.broadcast %cst_5 : f32 to vector<128x256xf32>
    %15 = arith.select %12, %13, %14 : vector<128x256xi1>, vector<128x256xf32>
    %16 = arith.mulf %15, %5 : vector<128x256xf32>
    %cst_6 = arith.constant dense<0.000000e+00> : vector<128xf32>
    %17 = vector.multi_reduction <add>, %16, %cst_6 [1] : vector<128x256xf32> to vector<128xf32>
    %18 = vector.shape_cast %17 : vector<128xf32> to vector<128x1xf32>
    %19 = arith.subf %9, %18 : vector<128x1xf32>
    %c-100_i32 = arith.constant -100 : i32
    %20 = vector.broadcast %c-100_i32 : i32 to vector<128x1xi32>
    %21 = arith.cmpi ne, %1, %20 : vector<128x1xi32>
    %cst_7 = arith.constant 0.000000e+00 : f32
    %22 = vector.broadcast %cst_7 : f32 to vector<128x1xf32>
    %23 = arith.select %21, %19, %22 : vector<128x1xi1>, vector<128x1xf32>
    %24 = vector.shape_cast %23 : vector<128x1xf32> to vector<1x128x1xf32>
    %cst_8 = arith.constant dense<0.000000e+00> : vector<1xf32>
    %25 = vector.multi_reduction <add>, %24, %cst_8 [1, 2] : vector<1x128x1xf32> to vector<1xf32>
    %26 = vector.shape_cast %25 : vector<1xf32> to vector<1x1x1xf32>
    %27 = vector.extract %26[0, 0, 0] : f32 from vector<1x1x1xf32>
    %28 = arith.extui %21 : vector<128x1xi1> to vector<128x1xi32>
    %29 = arith.sitofp %28 : vector<128x1xi32> to vector<128x1xf32>
    %30 = vector.shape_cast %29 : vector<128x1xf32> to vector<1x128x1xf32>
    %cst_9 = arith.constant dense<0.000000e+00> : vector<1xf32>
    %31 = vector.multi_reduction <add>, %30, %cst_9 [1, 2] : vector<1x128x1xf32> to vector<1xf32>
    %32 = vector.shape_cast %31 : vector<1xf32> to vector<1x1x1xf32>
    %33 = vector.extract %32[0, 0, 0] : f32 from vector<1x1x1xf32>
    %34 = vector.broadcast %27 : f32 to vector<1x1x1xf32>
    %35 = vector.broadcast %33 : f32 to vector<1x1x1xf32>
    %36 = tpu.concatenate %34, %35 in 2 : vector<1x1x1xf32>, vector<1x1x1xf32> -> vector<1x1x2xf32>
    %c0_10 = arith.constant 0 : index
    %c0_11 = arith.constant 0 : index
    %c0_12 = arith.constant 0 : index
    %37 = vector.load %arg3[%c0_10, %c0_11, %c0_12] : memref<1x1x2xf32, #tpu.memory_space<vmem>>, vector<1x1x2xf32>
    tpu.vector_store %arg3[%c0_10, %c0_11, %c0_12], %36 {strides = array<i32>} : memref<1x1x2xf32, #tpu.memory_space<vmem>>, vector<1x1x2xf32>,
    return
  }
  func.func @transform_0(%arg0: i32) -> (i32, i32) {
    %c0_i32 = arith.constant 0 : i32
    %c0_i32_0 = arith.constant 0 : i32
    return %arg0, %c0_i32 : i32, i32
  }
  func.func @transform_1(%arg0: i32) -> (i32, i32) {
    %c0_i32 = arith.constant 0 : i32
    %c0_i32_0 = arith.constant 0 : i32
    return %arg0, %c0_i32 : i32, i32
  }
  func.func @transform_2(%arg0: i32) -> (i32, i32, i32) {
    %c0_i32 = arith.constant 0 : i32
    %c0_i32_0 = arith.constant 0 : i32
    %c0_i32_1 = arith.constant 0 : i32
    return %arg0, %c0_i32, %c0_i32_0 : i32, i32, i32
  }
}

</mosaic_0001>

<llo_original>
// kernel: tpu_custom_call.1
$region0: #{tpu_custom_call.1}
  #allocation0 [shape = 'u32[]', space=smem, size = 0x4, offset = 0x4, fixed_abs, tag = 'smem constant byte address 0x4 - core index']
  #allocation1 [shape = 'u32[144,128]{1,0:T(1,128)}', space=vmem, size = 0x12000, scoped, tag = 'internal scratch']
  %s0 = inlined_call_operand.hbm [shape: f32[384,256], index: 0, kind: input, shape index: {}]
  %s1 = inlined_call_operand.vmem [shape: s32[384,1], index: 1, kind: input, shape index: {}]
  %s2 = inlined_call_operand.vmem [shape: f32[3,1,2], index: 2, kind: output, shape index: {}]
  %s3 = sld [smem:[#allocation0]]
  $region45: #{tpu_custom_call.1} parent=0
    _
  %s5 = ssub.s32 1, %s3
  %s6 = scalar_select 0, %s5, %s3
  $region1: #{tpu_custom_call.1} parent=0
    #allocation2 [shape = 'u8[262144]{0}', space=vmem, size = 0x40000, scoped, tag = 'input window, operand 0']
    #allocation3 [shape = 's32[2]{0}', space=sflag, size = 0x8, scoped, tag = 'scoped memory for tpu_custom_call.1']
    %7 = vsyncpa [#allocation3], 0
    %s8 = scalar_lea.sflag [#allocation3], 1
    %9 = vsyncpa %s8, 0
    loop: start=0, step=1, limit=5
    $region2: #{tpu_custom_call.1} parent=1 // loop_pre_header
      _
    $region3: #{tpu_custom_call.1} parent=1 // loop_header
      %s11 = sphi 0, %s15
      %p12 = scmp.ge.s32.totalorder %s11, 5
      %s21 = sphi 0, %s23
      %s24 = sphi 0, %s21
      %s25 = sphi 0, %s24
      %s41 = sphi 0, %s25
      %s47 = sphi 0, %s49
      %s50 = sphi 0, %s47
      %s51 = sphi 0, %s50
      %s67 = sphi 0, %s51
      %s73 = sphi 0, %s75
      %s76 = sphi 0, %s73
      %s77 = sphi 0, %s76
      %s93 = sphi 0, %s77
    $region4: #{tpu_custom_call.1} parent=1 // loop_header_branch
      %14 = sbr.rel (%p12) target = $region8
    $region5: #{tpu_custom_call.1} parent=1 // loop_body
      %s16 = ssub.s32 %s11, 1
      %s17 = ssub.s32 %s11, 2
      %s18 = sadd.s32 %s11, 1
      %s19 = ssub.s32 %s11, %s18
      %p20 = scmp.eq.s32.totalorder %s19, 0
      %s22 = sadd.s32 %s21, 1
      %s23 = scalar_select %p20, %s21, %s22
      %p26 = pneg %p20
      %p27 = scmp.eq.s32.totalorder %s11, 2
      %p28 = por %p26, %p27
      %p29 = scmp.ne.s32.totalorder %s21, %s24
      %p30 = scmp.eq.s32.totalorder %s11, 0
      %p31 = por %p29, %p30
      %p32 = scmp.ne.s32.totalorder %s21, %s24
      %p33 = scmp.eq.s32.totalorder %s16, 2
      %p34 = por %p32, %p33
      %p35 = scmp.ne.s32.totalorder %s24, %s25
      %p36 = scmp.eq.s32.totalorder %s16, 0
      %p37 = por %p35, %p36
      %p38 = scmp.ne.s32.totalorder %s24, %s25
      %p39 = scmp.eq.s32.totalorder %s17, 2
      %p40 = por %p38, %p39
      %p42 = scmp.ne.s32.totalorder %s25, %s41
      %p43 = scmp.eq.s32.totalorder %s17, 0
      %p44 = por %p42, %p43
      %s45 = ssub.s32 %s11, %s18
      %p46 = scmp.eq.s32.totalorder %s45, 0
      %s48 = sadd.s32 %s47, 1
      %s49 = scalar_select %p46, %s47, %s48
      %p52 = pneg %p46
      %p53 = scmp.eq.s32.totalorder %s11, 2
      %p54 = por %p52, %p53
      %p55 = scmp.ne.s32.totalorder %s47, %s50
      %p56 = scmp.eq.s32.totalorder %s11, 0
      %p57 = por %p55, %p56
      %p58 = scmp.ne.s32.totalorder %s47, %s50
      %p59 = scmp.eq.s32.totalorder %s16, 2
      %p60 = por %p58, %p59
      %p61 = scmp.ne.s32.totalorder %s50, %s51
      %p62 = scmp.eq.s32.totalorder %s16, 0
      %p63 = por %p61, %p62
      %p64 = scmp.ne.s32.totalorder %s50, %s51
      %p65 = scmp.eq.s32.totalorder %s17, 2
      %p66 = por %p64, %p65
      %p68 = scmp.ne.s32.totalorder %s51, %s67
      %p69 = scmp.eq.s32.totalorder %s17, 0
      %p70 = por %p68, %p69
      %s71 = ssub.s32 %s11, %s18
      %p72 = scmp.eq.s32.totalorder %s71, 0
      %s74 = sadd.s32 %s73, 1
      %s75 = scalar_select %p72, %s73, %s74
      %p78 = pneg %p72
      %p79 = scmp.eq.s32.totalorder %s11, 2
      %p80 = por %p78, %p79
      %p81 = scmp.ne.s32.totalorder %s73, %s76
      %p82 = scmp.eq.s32.totalorder %s11, 0
      %p83 = por %p81, %p82
      %p84 = scmp.ne.s32.totalorder %s73, %s76
      %p85 = scmp.eq.s32.totalorder %s16, 2
      %p86 = por %p84, %p85
      %p87 = scmp.ne.s32.totalorder %s76, %s77
      %p88 = scmp.eq.s32.totalorder %s16, 0
      %p89 = por %p87, %p88
      %p90 = scmp.ne.s32.totalorder %s76, %s77
      %p91 = scmp.eq.s32.totalorder %s17, 2
      %p92 = por %p90, %p91
      %p94 = scmp.ne.s32.totalorder %s77, %s93
      %p95 = scmp.eq.s32.totalorder %s17, 0
      %p96 = por %p94, %p95
      %p97 = scmp.le.s32.totalorder 1, %s11
      %p98 = scmp.lt.s32.totalorder %s11, 4
      %p99 = pnand %p97, %p98
      %p100 = pneg %p99
      // Predicated region
      $region9: #{tpu_custom_call.1} parent=5 // pred_check
        _
      $region10: #{tpu_custom_call.1} parent=5 // pred_check_branch
        %102 = sbr.rel (%p99) target = $region12
      $region11: #{tpu_custom_call.1} parent=5 // pred_region
        %s103 = ssub.s32 %s11, 1
      $region12: #{tpu_custom_call.1} parent=5 // pred_fallthru
        _
      %p104 = scmp.lt.s32.totalorder %s11, 3
      // Predicated region
      $region13: #{tpu_custom_call.1} parent=5 // pred_check
        %p105 = pneg %p104
      $region14: #{tpu_custom_call.1} parent=5 // pred_check_branch
        %107 = sbr.rel (%p105) target = $region16
      $region15: #{tpu_custom_call.1} parent=5 // pred_region
        // Predicated region
        $region17: #{tpu_custom_call.1} parent=15 // pred_check
          %p108 = pneg %p31
        $region18: #{tpu_custom_call.1} parent=15 // pred_check_branch
          %110 = sbr.rel (%p108) target = $region20
        $region19: #{tpu_custom_call.1} parent=15 // pred_region
          %s111 = sand.u32 %s21, 1
          %s112 = scalar_lea.sflag [#allocation3], %s111
          %s113 = sand.u32 %s21, 1
          %s114 = smul.addr %s113, 256
          %s115 = scalar_lea.vmem [#allocation2], %s114
          %s116 = smul.u32 16, %s11
          %s118 = ssub.s32 4096, 4096
          %119 = vsyncadd %s112, %s118
          %s120 = smul.addr %s116, 2
          %s121 = smul.addr %s120, 128
          %s122 = scalar_lea.hbm %s0, %s121
          %s123 = sshll.u32 %s115, 4
          %s124 = int_to_ptr.vmem [resolvable:$true] %s123
          %129 = dma.hbm_to_vmem [thread:$0]  %s122, 4096, %s124, %s112, 256, 256, 16
        $region20: #{tpu_custom_call.1} parent=15 // pred_fallthru
          _
        // Predicated region
        $region21: #{tpu_custom_call.1} parent=15 // pred_check
          %p130 = pneg %p57
        $region22: #{tpu_custom_call.1} parent=15 // pred_check_branch
          %132 = sbr.rel (%p130) target = $region24
        $region23: #{tpu_custom_call.1} parent=15 // pred_region
          %s133 = smul.u32 16, %s11
          %p134 = scmp.lt.s32.totalorder %s133, 47
          %s135 = scalar_select %p134, %s133, 47
          %s136 = smul.addr %s135, 8
          %s137 = scalar_lea.vmem %s1, %s136
          %s138 = smul.u32 16, %s11
        $region24: #{tpu_custom_call.1} parent=15 // pred_fallthru
          _
      $region16: #{tpu_custom_call.1} parent=5 // pred_fallthru
        _
      %p139 = scmp.le.s32.totalorder 1, %s11
      %p140 = scmp.lt.s32.totalorder %s11, 4
      %p141 = pnand %p139, %p140
      %p142 = pneg %p141
      // Predicated region
      $region25: #{tpu_custom_call.1} parent=5 // pred_check
        _
      $region26: #{tpu_custom_call.1} parent=5 // pred_check_branch
        %144 = sbr.rel (%p141) target = $region28
      $region27: #{tpu_custom_call.1} parent=5 // pred_region
        %s145 = ssub.s32 %s11, 1
        %s146 = sand.u32 %s24, 1
        %s147 = scalar_lea.sflag [#allocation3], %s146
        %s148 = sand.u32 %s24, 1
        %s149 = smul.addr %s148, 256
        %s150 = scalar_lea.vmem [#allocation2], %s149
        // Predicated region
        $region29: #{tpu_custom_call.1} parent=27 // pred_check
          %p151 = pneg %p37
        $region30: #{tpu_custom_call.1} parent=27 // pred_check_branch
          %153 = sbr.rel (%p151) target = $region32
        $region31: #{tpu_custom_call.1} parent=27 // pred_region
          %154 = dma.done %s147, 4096
        $region32: #{tpu_custom_call.1} parent=27 // pred_fallthru
          _
        %s155 = sand.u32 %s24, 1
        %s156 = scalar_lea.sflag [#allocation3], %s155
        %s157 = sand.u32 %s24, 1
        %s158 = smul.addr %s157, 256
        %s159 = scalar_lea.vmem [#allocation2], %s158
        %p160 = pneg %p37
        %p161 = pneg %p34
        %s162 = smul.u32 16, %s16
        %p163 = scmp.lt.s32.totalorder %s162, 47
        %s164 = scalar_select %p163, %s162, 47
        %s165 = smul.addr %s164, 8
        %s166 = scalar_lea.vmem %s1, %s165
        %p167 = pneg %p63
        %p168 = pneg %p60
        %p169 = pneg %p89
        %p170 = pneg %p86
        %p171 = scmp.lt.s32.totalorder %s16, 2
        %s172 = scalar_select %p171, %s16, 2
        %s173 = scalar_lea.vmem %s2, %s172
        %s174 = smul.u32 16, %s16
        %s175 = smul.u32 16, %s16
        %p176 = scmp.lt.s32.totalorder %s175, 47
        %s177 = scalar_select %p176, %s175, 47
        %s178 = smul.addr %s177, 8
        %s179 = scalar_lea.vmem %s1, %s178
        %s180 = smul.u32 16, %s16
        %p181 = scmp.lt.s32.totalorder %s16, 2
        %s182 = scalar_select %p181, %s16, 2
        %s183 = scalar_lea.vmem %s2, %s182
        %v184 = vld [vmem:[%s150] sm:$0xff]
        %v185 = vld [vmem:[%s150 + $0x8] sm:$0xff]
        %v186 = vld [vmem:[%s150 + $0x10] sm:$0xff]
        %v187 = vld [vmem:[%s150 + $0x18] sm:$0xff]
        %v188 = vld [vmem:[%s150 + $0x20] sm:$0xff]
        %v189 = vld [vmem:[%s150 + $0x28] sm:$0xff]
        %v190 = vld [vmem:[%s150 + $0x30] sm:$0xff]
        %v191 = vld [vmem:[%s150 + $0x38] sm:$0xff]
        %v192 = vld [vmem:[%s150 + $0x40] sm:$0xff]
        %v193 = vld [vmem:[%s150 + $0x48] sm:$0xff]
        %v194 = vld [vmem:[%s150 + $0x50] sm:$0xff]
        %v195 = vld [vmem:[%s150 + $0x58] sm:$0xff]
        %v196 = vld [vmem:[%s150 + $0x60] sm:$0xff]
        %v197 = vld [vmem:[%s150 + $0x68] sm:$0xff]
        %v198 = vld [vmem:[%s150 + $0x70] sm:$0xff]
        %v199 = vld [vmem:[%s150 + $0x78] sm:$0xff]
        %v200 = vld [vmem:[%s150 + $0x80] sm:$0xff]
        %v201 = vld [vmem:[%s150 + $0x88] sm:$0xff]
        %v202 = vld [vmem:[%s150 + $0x90] sm:$0xff]
        %v203 = vld [vmem:[%s150 + $0x98] sm:$0xff]
        %v204 = vld [vmem:[%s150 + $0xa0] sm:$0xff]
        %v205 = vld [vmem:[%s150 + $0xa8] sm:$0xff]
        %v206 = vld [vmem:[%s150 + $0xb0] sm:$0xff]
        %v207 = vld [vmem:[%s150 + $0xb8] sm:$0xff]
        %v208 = vld [vmem:[%s150 + $0xc0] sm:$0xff]
        %v209 = vld [vmem:[%s150 + $0xc8] sm:$0xff]
        %v210 = vld [vmem:[%s150 + $0xd0] sm:$0xff]
        %v211 = vld [vmem:[%s150 + $0xd8] sm:$0xff]
        %v212 = vld [vmem:[%s150 + $0xe0] sm:$0xff]
        %v213 = vld [vmem:[%s150 + $0xe8] sm:$0xff]
        %v214 = vld [vmem:[%s150 + $0xf0] sm:$0xff]
        %v215 = vld [vmem:[%s150 + $0xf8] sm:$0xff]
        %v216 = vld [vmem:[%s179] sm:$0xff]
        %v217 = vld [vmem:[%s179 + $0x8] sm:$0xff]
        %v218 = vld [vmem:[%s179 + $0x10] sm:$0xff]
        %v219 = vld [vmem:[%s179 + $0x18] sm:$0xff]
        %v220 = vld [vmem:[%s179 + $0x20] sm:$0xff]
        %v221 = vld [vmem:[%s179 + $0x28] sm:$0xff]
        %v222 = vld [vmem:[%s179 + $0x30] sm:$0xff]
        %v223 = vld [vmem:[%s179 + $0x38] sm:$0xff]
        %v224 = vld [vmem:[%s179 + $0x40] sm:$0xff]
        %v225 = vld [vmem:[%s179 + $0x48] sm:$0xff]
        %v226 = vld [vmem:[%s179 + $0x50] sm:$0xff]
        %v227 = vld [vmem:[%s179 + $0x58] sm:$0xff]
        %v228 = vld [vmem:[%s179 + $0x60] sm:$0xff]
        %v229 = vld [vmem:[%s179 + $0x68] sm:$0xff]
        %v230 = vld [vmem:[%s179 + $0x70] sm:$0xff]
        %v231 = vld [vmem:[%s179 + $0x78] sm:$0xff]
        %v232 = vmax.f32 %v184, %v185
        %233 = vmax.xlane.f32.xlu0 %v232
        %v234 = vpop.xlane.xlu0 %233
        %v235 = vmax.f32 %v186, %v187
        %236 = vmax.xlane.f32.xlu0 %v235
        %v237 = vpop.xlane.xlu0 %236
        %v238 = vmax.f32 %v188, %v189
        %239 = vmax.xlane.f32.xlu0 %v238
        %v240 = vpop.xlane.xlu0 %239
        %v241 = vmax.f32 %v190, %v191
        %242 = vmax.xlane.f32.xlu0 %v241
        %v243 = vpop.xlane.xlu0 %242
        %v244 = vmax.f32 %v192, %v193
        %245 = vmax.xlane.f32.xlu0 %v244
        %v246 = vpop.xlane.xlu0 %245
        %v247 = vmax.f32 %v194, %v195
        %248 = vmax.xlane.f32.xlu0 %v247
        %v249 = vpop.xlane.xlu0 %248
        %v250 = vmax.f32 %v196, %v197
        %251 = vmax.xlane.f32.xlu0 %v250
        %v252 = vpop.xlane.xlu0 %251
        %v253 = vmax.f32 %v198, %v199
        %254 = vmax.xlane.f32.xlu0 %v253
        %v255 = vpop.xlane.xlu0 %254
        %v256 = vmax.f32 %v200, %v201
        %257 = vmax.xlane.f32.xlu0 %v256
        %v258 = vpop.xlane.xlu0 %257
        %v259 = vmax.f32 %v202, %v203
        %260 = vmax.xlane.f32.xlu0 %v259
        %v261 = vpop.xlane.xlu0 %260
        %v262 = vmax.f32 %v204, %v205
        %263 = vmax.xlane.f32.xlu0 %v262
        %v264 = vpop.xlane.xlu0 %263
        %v265 = vmax.f32 %v206, %v207
        %266 = vmax.xlane.f32.xlu0 %v265
        %v267 = vpop.xlane.xlu0 %266
        %v268 = vmax.f32 %v208, %v209
        %269 = vmax.xlane.f32.xlu0 %v268
        %v270 = vpop.xlane.xlu0 %269
        %v271 = vmax.f32 %v210, %v211
        %272 = vmax.xlane.f32.xlu0 %v271
        %v273 = vpop.xlane.xlu0 %272
        %v274 = vmax.f32 %v212, %v213
        %275 = vmax.xlane.f32.xlu0 %v274
        %v276 = vpop.xlane.xlu0 %275
        %v277 = vmax.f32 %v214, %v215
        %278 = vmax.xlane.f32.xlu0 %v277
        %v279 = vpop.xlane.xlu0 %278
        %v280 = vsub.f32 %v184, %v234
        %v281 = vsub.f32 %v185, %v234
        %v282 = vsub.f32 %v186, %v237
        %v283 = vsub.f32 %v187, %v237
        %v284 = vsub.f32 %v188, %v240
        %v285 = vsub.f32 %v189, %v240
        %v286 = vsub.f32 %v190, %v243
        %v287 = vsub.f32 %v191, %v243
        %v288 = vsub.f32 %v192, %v246
        %v289 = vsub.f32 %v193, %v246
        %v290 = vsub.f32 %v194, %v249
        %v291 = vsub.f32 %v195, %v249
        %v292 = vsub.f32 %v196, %v252
        %v293 = vsub.f32 %v197, %v252
        %v294 = vsub.f32 %v198, %v255
        %v295 = vsub.f32 %v199, %v255
        %v296 = vsub.f32 %v200, %v258
        %v297 = vsub.f32 %v201, %v258
        %v298 = vsub.f32 %v202, %v261
        %v299 = vsub.f32 %v203, %v261
        %v300 = vsub.f32 %v204, %v264
        %v301 = vsub.f32 %v205, %v264
        %v302 = vsub.f32 %v206, %v267
        %v303 = vsub.f32 %v207, %v267
        %v304 = vsub.f32 %v208, %v270
        %v305 = vsub.f32 %v209, %v270
        %v306 = vsub.f32 %v210, %v273
        %v307 = vsub.f32 %v211, %v273
        %v308 = vsub.f32 %v212, %v276
        %v309 = vsub.f32 %v213, %v276
        %v310 = vsub.f32 %v214, %v279
        %v311 = vsub.f32 %v215, %v279
        %v312 = vmul.f32 %v280, 1.442695
        %v313 = vpow.pop %v312
        %v314 = vmul.f32 %v281, 1.442695
        %v315 = vpow.pop %v314
        %v316 = vmul.f32 %v282, 1.442695
        %v317 = vpow.pop %v316
        %v318 = vmul.f32 %v283, 1.442695
        %v319 = vpow.pop %v318
        %v320 = vmul.f32 %v284, 1.442695
        %v321 = vpow.pop %v320
        %v322 = vmul.f32 %v285, 1.442695
        %v323 = vpow.pop %v322
        %v324 = vmul.f32 %v286, 1.442695
        %v325 = vpow.pop %v324
        %v326 = vmul.f32 %v287, 1.442695
        %v327 = vpow.pop %v326
        %v328 = vmul.f32 %v288, 1.442695
        %v329 = vpow.pop %v328
        %v330 = vmul.f32 %v289, 1.442695
        %v331 = vpow.pop %v330
        %v332 = vmul.f32 %v290, 1.442695
        %v333 = vpow.pop %v332
        %v334 = vmul.f32 %v291, 1.442695
        %v335 = vpow.pop %v334
        %v336 = vmul.f32 %v292, 1.442695
        %v337 = vpow.pop %v336
        %v338 = vmul.f32 %v293, 1.442695
        %v339 = vpow.pop %v338
        %v340 = vmul.f32 %v294, 1.442695
        %v341 = vpow.pop %v340
        %v342 = vmul.f32 %v295, 1.442695
        %v343 = vpow.pop %v342
        %v344 = vmul.f32 %v296, 1.442695
        %v345 = vpow.pop %v344
        %v346 = vmul.f32 %v297, 1.442695
        %v347 = vpow.pop %v346
        %v348 = vmul.f32 %v298, 1.442695
        %v349 = vpow.pop %v348
        %v350 = vmul.f32 %v299, 1.442695
        %v351 = vpow.pop %v350
        %v352 = vmul.f32 %v300, 1.442695
        %v353 = vpow.pop %v352
        %v354 = vmul.f32 %v301, 1.442695
        %v355 = vpow.pop %v354
        %v356 = vmul.f32 %v302, 1.442695
        %v357 = vpow.pop %v356
        %v358 = vmul.f32 %v303, 1.442695
        %v359 = vpow.pop %v358
        %v360 = vmul.f32 %v304, 1.442695
        %v361 = vpow.pop %v360
        %v362 = vmul.f32 %v305, 1.442695
        %v363 = vpow.pop %v362
        %v364 = vmul.f32 %v306, 1.442695
        %v365 = vpow.pop %v364
        %v366 = vmul.f32 %v307, 1.442695
        %v367 = vpow.pop %v366
        %v368 = vmul.f32 %v308, 1.442695
        %v369 = vpow.pop %v368
        %v370 = vmul.f32 %v309, 1.442695
        %v371 = vpow.pop %v370
        %v372 = vmul.f32 %v310, 1.442695
        %v373 = vpow.pop %v372
        %v374 = vmul.f32 %v311, 1.442695
        %v375 = vpow.pop %v374
        %v376 = vadd.f32 %v313, %v315
        %377 = vadd.xlane.f32.xlu0 %v376
        %v378 = vpop.xlane.xlu0 %377
        %v379 = vadd.f32 %v317, %v319
        %380 = vadd.xlane.f32.xlu0 %v379
        %v381 = vpop.xlane.xlu0 %380
        %v382 = vadd.f32 %v321, %v323
        %383 = vadd.xlane.f32.xlu0 %v382
        %v384 = vpop.xlane.xlu0 %383
        %v385 = vadd.f32 %v325, %v327
        %386 = vadd.xlane.f32.xlu0 %v385
        %v387 = vpop.xlane.xlu0 %386
        %v388 = vadd.f32 %v329, %v331
        %389 = vadd.xlane.f32.xlu0 %v388
        %v390 = vpop.xlane.xlu0 %389
        %v391 = vadd.f32 %v333, %v335
        %392 = vadd.xlane.f32.xlu0 %v391
        %v393 = vpop.xlane.xlu0 %392
        %v394 = vadd.f32 %v337, %v339
        %395 = vadd.xlane.f32.xlu0 %v394
        %v396 = vpop.xlane.xlu0 %395
        %v397 = vadd.f32 %v341, %v343
        %398 = vadd.xlane.f32.xlu0 %v397
        %v399 = vpop.xlane.xlu0 %398
        %v400 = vadd.f32 %v345, %v347
        %401 = vadd.xlane.f32.xlu0 %v400
        %v402 = vpop.xlane.xlu0 %401
        %v403 = vadd.f32 %v349, %v351
        %404 = vadd.xlane.f32.xlu0 %v403
        %v405 = vpop.xlane.xlu0 %404
        %v406 = vadd.f32 %v353, %v355
        %407 = vadd.xlane.f32.xlu0 %v406
        %v408 = vpop.xlane.xlu0 %407
        %v409 = vadd.f32 %v357, %v359
        %410 = vadd.xlane.f32.xlu0 %v409
        %v411 = vpop.xlane.xlu0 %410
        %v412 = vadd.f32 %v361, %v363
        %413 = vadd.xlane.f32.xlu0 %v412
        %v414 = vpop.xlane.xlu0 %413
        %v415 = vadd.f32 %v365, %v367
        %416 = vadd.xlane.f32.xlu0 %v415
        %v417 = vpop.xlane.xlu0 %416
        %v418 = vadd.f32 %v369, %v371
        %419 = vadd.xlane.f32.xlu0 %v418
        %v420 = vpop.xlane.xlu0 %419
        %v421 = vadd.f32 %v373, %v375
        %422 = vadd.xlane.f32.xlu0 %v421
        %v423 = vpop.xlane.xlu0 %422
        %v424 = vlog2.pop %v378
        %v425 = vmul.f32 %v424, 0.6931472
        %v426 = vlog2.pop %v381
        %v427 = vmul.f32 %v426, 0.6931472
        %v428 = vlog2.pop %v384
        %v429 = vmul.f32 %v428, 0.6931472
        %v430 = vlog2.pop %v387
        %v431 = vmul.f32 %v430, 0.6931472
        %v432 = vlog2.pop %v390
        %v433 = vmul.f32 %v432, 0.6931472
        %v434 = vlog2.pop %v393
        %v435 = vmul.f32 %v434, 0.6931472
        %v436 = vlog2.pop %v396
        %v437 = vmul.f32 %v436, 0.6931472
        %v438 = vlog2.pop %v399
        %v439 = vmul.f32 %v438, 0.6931472
        %v440 = vlog2.pop %v402
        %v441 = vmul.f32 %v440, 0.6931472
        %v442 = vlog2.pop %v405
        %v443 = vmul.f32 %v442, 0.6931472
        %v444 = vlog2.pop %v408
        %v445 = vmul.f32 %v444, 0.6931472
        %v446 = vlog2.pop %v411
        %v447 = vmul.f32 %v446, 0.6931472
        %v448 = vlog2.pop %v414
        %v449 = vmul.f32 %v448, 0.6931472
        %v450 = vlog2.pop %v417
        %v451 = vmul.f32 %v450, 0.6931472
        %v452 = vlog2.pop %v420
        %v453 = vmul.f32 %v452, 0.6931472
        %v454 = vlog2.pop %v423
        %v455 = vmul.f32 %v454, 0.6931472
        %v456 = vlaneseq
        %v457 = vand.u32 %v456, 127
        %v458 = vadd.s32 %v457, 128
        %459 = vset.pattern.permute.xlu0 0
        %460 = vperm.xlu0 %459, %v216
        %v461 = vpop.permute.xlu0 %460
        %462 = vset.pattern.permute.xlu0 0
        %463 = vperm.xlu0 %462, %v217
        %v464 = vpop.permute.xlu0 %463
        %465 = vset.pattern.permute.xlu0 0
        %466 = vperm.xlu0 %465, %v218
        %v467 = vpop.permute.xlu0 %466
        %468 = vset.pattern.permute.xlu0 0
        %469 = vperm.xlu0 %468, %v219
        %v470 = vpop.permute.xlu0 %469
        %471 = vset.pattern.permute.xlu0 0
        %472 = vperm.xlu0 %471, %v220
        %v473 = vpop.permute.xlu0 %472
        %474 = vset.pattern.permute.xlu0 0
        %475 = vperm.xlu0 %474, %v221
        %v476 = vpop.permute.xlu0 %475
        %477 = vset.pattern.permute.xlu0 0
        %478 = vperm.xlu0 %477, %v222
        %v479 = vpop.permute.xlu0 %478
        %480 = vset.pattern.permute.xlu0 0
        %481 = vperm.xlu0 %480, %v223
        %v482 = vpop.permute.xlu0 %481
        %483 = vset.pattern.permute.xlu0 0
        %484 = vperm.xlu0 %483, %v224
        %v485 = vpop.permute.xlu0 %484
        %486 = vset.pattern.permute.xlu0 0
        %487 = vperm.xlu0 %486, %v225
        %v488 = vpop.permute.xlu0 %487
        %489 = vset.pattern.permute.xlu0 0
        %490 = vperm.xlu0 %489, %v226
        %v491 = vpop.permute.xlu0 %490
        %492 = vset.pattern.permute.xlu0 0
        %493 = vperm.xlu0 %492, %v227
        %v494 = vpop.permute.xlu0 %493
        %495 = vset.pattern.permute.xlu0 0
        %496 = vperm.xlu0 %495, %v228
        %v497 = vpop.permute.xlu0 %496
        %498 = vset.pattern.permute.xlu0 0
        %499 = vperm.xlu0 %498, %v229
        %v500 = vpop.permute.xlu0 %499
        %501 = vset.pattern.permute.xlu0 0
        %502 = vperm.xlu0 %501, %v230
        %v503 = vpop.permute.xlu0 %502
        %504 = vset.pattern.permute.xlu0 0
        %505 = vperm.xlu0 %504, %v231
        %v506 = vpop.permute.xlu0 %505
        %vm507 = vcmp.eq.s32.totalorder %v457, %v461
        %vm508 = vcmp.eq.s32.totalorder %v458, %v461
        %vm509 = vcmp.eq.s32.totalorder %v457, %v464
        %vm510 = vcmp.eq.s32.totalorder %v458, %v464
        %vm511 = vcmp.eq.s32.totalorder %v457, %v467
        %vm512 = vcmp.eq.s32.totalorder %v458, %v467
        %vm513 = vcmp.eq.s32.totalorder %v457, %v470
        %vm514 = vcmp.eq.s32.totalorder %v458, %v470
        %vm515 = vcmp.eq.s32.totalorder %v457, %v473
        %vm516 = vcmp.eq.s32.totalorder %v458, %v473
        %vm517 = vcmp.eq.s32.totalorder %v457, %v476
        %vm518 = vcmp.eq.s32.totalorder %v458, %v476
        %vm519 = vcmp.eq.s32.totalorder %v457, %v479
        %vm520 = vcmp.eq.s32.totalorder %v458, %v479
        %vm521 = vcmp.eq.s32.totalorder %v457, %v482
        %vm522 = vcmp.eq.s32.totalorder %v458, %v482
        %vm523 = vcmp.eq.s32.totalorder %v457, %v485
        %vm524 = vcmp.eq.s32.totalorder %v458, %v485
        %vm525 = vcmp.eq.s32.totalorder %v457, %v488
        %vm526 = vcmp.eq.s32.totalorder %v458, %v488
        %vm527 = vcmp.eq.s32.totalorder %v457, %v491
        %vm528 = vcmp.eq.s32.totalorder %v458, %v491
        %vm529 = vcmp.eq.s32.totalorder %v457, %v494
        %vm530 = vcmp.eq.s32.totalorder %v458, %v494
        %vm531 = vcmp.eq.s32.totalorder %v457, %v497
        %vm532 = vcmp.eq.s32.totalorder %v458, %v497
        %vm533 = vcmp.eq.s32.totalorder %v457, %v500
        %vm534 = vcmp.eq.s32.totalorder %v458, %v500
        %vm535 = vcmp.eq.s32.totalorder %v457, %v503
        %vm536 = vcmp.eq.s32.totalorder %v458, %v503
        %vm537 = vcmp.eq.s32.totalorder %v457, %v506
        %vm538 = vcmp.eq.s32.totalorder %v458, %v506
        %v539 = vsel %vm507, 0.9, 0.00039215686
        %v540 = vsel %vm508, 0.9, 0.00039215686
        %v541 = vsel %vm509, 0.9, 0.00039215686
        %v542 = vsel %vm510, 0.9, 0.00039215686
        %v543 = vsel %vm511, 0.9, 0.00039215686
        %v544 = vsel %vm512, 0.9, 0.00039215686
        %v545 = vsel %vm513, 0.9, 0.00039215686
        %v546 = vsel %vm514, 0.9, 0.00039215686
        %v547 = vsel %vm515, 0.9, 0.00039215686
        %v548 = vsel %vm516, 0.9, 0.00039215686
        %v549 = vsel %vm517, 0.9, 0.00039215686
        %v550 = vsel %vm518, 0.9, 0.00039215686
        %v551 = vsel %vm519, 0.9, 0.00039215686
        %v552 = vsel %vm520, 0.9, 0.00039215686
        %v553 = vsel %vm521, 0.9, 0.00039215686
        %v554 = vsel %vm522, 0.9, 0.00039215686
        %v555 = vsel %vm523, 0.9, 0.00039215686
        %v556 = vsel %vm524, 0.9, 0.00039215686
        %v557 = vsel %vm525, 0.9, 0.00039215686
        %v558 = vsel %vm526, 0.9, 0.00039215686
        %v559 = vsel %vm527, 0.9, 0.00039215686
        %v560 = vsel %vm528, 0.9, 0.00039215686
        %v561 = vsel %vm529, 0.9, 0.00039215686
        %v562 = vsel %vm530, 0.9, 0.00039215686
        %v563 = vsel %vm531, 0.9, 0.00039215686
        %v564 = vsel %vm532, 0.9, 0.00039215686
        %v565 = vsel %vm533, 0.9, 0.00039215686
        %v566 = vsel %vm534, 0.9, 0.00039215686
        %v567 = vsel %vm535, 0.9, 0.00039215686
        %v568 = vsel %vm536, 0.9, 0.00039215686
        %v569 = vsel %vm537, 0.9, 0.00039215686
        %v570 = vsel %vm538, 0.9, 0.00039215686
        %v571 = vmul.f32 %v539, %v280
        %v572 = vmul.f32 %v540, %v281
        %v573 = vmul.f32 %v541, %v282
        %v574 = vmul.f32 %v542, %v283
        %v575 = vmul.f32 %v543, %v284
        %v576 = vmul.f32 %v544, %v285
        %v577 = vmul.f32 %v545, %v286
        %v578 = vmul.f32 %v546, %v287
        %v579 = vmul.f32 %v547, %v288
        %v580 = vmul.f32 %v548, %v289
        %v581 = vmul.f32 %v549, %v290
        %v582 = vmul.f32 %v550, %v291
        %v583 = vmul.f32 %v551, %v292
        %v584 = vmul.f32 %v552, %v293
        %v585 = vmul.f32 %v553, %v294
        %v586 = vmul.f32 %v554, %v295
        %v587 = vmul.f32 %v555, %v296
        %v588 = vmul.f32 %v556, %v297
        %v589 = vmul.f32 %v557, %v298
        %v590 = vmul.f32 %v558, %v299
        %v591 = vmul.f32 %v559, %v300
        %v592 = vmul.f32 %v560, %v301
        %v593 = vmul.f32 %v561, %v302
        %v594 = vmul.f32 %v562, %v303
        %v595 = vmul.f32 %v563, %v304
        %v596 = vmul.f32 %v564, %v305
        %v597 = vmul.f32 %v565, %v306
        %v598 = vmul.f32 %v566, %v307
        %v599 = vmul.f32 %v567, %v308
        %v600 = vmul.f32 %v568, %v309
        %v601 = vmul.f32 %v569, %v310
        %v602 = vmul.f32 %v570, %v311
        %v603 = vadd.f32 %v571, %v572
        %604 = vadd.xlane.f32.xlu0 %v603
        %v605 = vpop.xlane.xlu0 %604
        %v606 = vadd.f32 %v573, %v574
        %607 = vadd.xlane.f32.xlu0 %v606
        %v608 = vpop.xlane.xlu0 %607
        %v609 = vadd.f32 %v575, %v576
        %610 = vadd.xlane.f32.xlu0 %v609
        %v611 = vpop.xlane.xlu0 %610
        %v612 = vadd.f32 %v577, %v578
        %613 = vadd.xlane.f32.xlu0 %v612
        %v614 = vpop.xlane.xlu0 %613
        %v615 = vadd.f32 %v579, %v580
        %616 = vadd.xlane.f32.xlu0 %v615
        %v617 = vpop.xlane.xlu0 %616
        %v618 = vadd.f32 %v581, %v582
        %619 = vadd.xlane.f32.xlu0 %v618
        %v620 = vpop.xlane.xlu0 %619
        %v621 = vadd.f32 %v583, %v584
        %622 = vadd.xlane.f32.xlu0 %v621
        %v623 = vpop.xlane.xlu0 %622
        %v624 = vadd.f32 %v585, %v586
        %625 = vadd.xlane.f32.xlu0 %v624
        %v626 = vpop.xlane.xlu0 %625
        %v627 = vadd.f32 %v587, %v588
        %628 = vadd.xlane.f32.xlu0 %v627
        %v629 = vpop.xlane.xlu0 %628
        %v630 = vadd.f32 %v589, %v590
        %631 = vadd.xlane.f32.xlu0 %v630
        %v632 = vpop.xlane.xlu0 %631
        %v633 = vadd.f32 %v591, %v592
        %634 = vadd.xlane.f32.xlu0 %v633
        %v635 = vpop.xlane.xlu0 %634
        %v636 = vadd.f32 %v593, %v594
        %637 = vadd.xlane.f32.xlu0 %v636
        %v638 = vpop.xlane.xlu0 %637
        %v639 = vadd.f32 %v595, %v596
        %640 = vadd.xlane.f32.xlu0 %v639
        %v641 = vpop.xlane.xlu0 %640
        %v642 = vadd.f32 %v597, %v598
        %643 = vadd.xlane.f32.xlu0 %v642
        %v644 = vpop.xlane.xlu0 %643
        %v645 = vadd.f32 %v599, %v600
        %646 = vadd.xlane.f32.xlu0 %v645
        %v647 = vpop.xlane.xlu0 %646
        %v648 = vadd.f32 %v601, %v602
        %649 = vadd.xlane.f32.xlu0 %v648
        %v650 = vpop.xlane.xlu0 %649
        %v651 = vsub.f32 %v425, %v605
        %v652 = vsub.f32 %v427, %v608
        %v653 = vsub.f32 %v429, %v611
        %v654 = vsub.f32 %v431, %v614
        %v655 = vsub.f32 %v433, %v617
        %v656 = vsub.f32 %v435, %v620
        %v657 = vsub.f32 %v437, %v623
        %v658 = vsub.f32 %v439, %v626
        %v659 = vsub.f32 %v441, %v629
        %v660 = vsub.f32 %v443, %v632
        %v661 = vsub.f32 %v445, %v635
        %v662 = vsub.f32 %v447, %v638
        %v663 = vsub.f32 %v449, %v641
        %v664 = vsub.f32 %v451, %v644
        %v665 = vsub.f32 %v453, %v647
        %v666 = vsub.f32 %v455, %v650
        %vm667 = vcmp.ne.s32.totalorder %v216, 4294967196
        %vm668 = vcmp.ne.s32.totalorder %v217, 4294967196
        %vm669 = vcmp.ne.s32.totalorder %v218, 4294967196
        %vm670 = vcmp.ne.s32.totalorder %v219, 4294967196
        %vm671 = vcmp.ne.s32.totalorder %v220, 4294967196
        %vm672 = vcmp.ne.s32.totalorder %v221, 4294967196
        %vm673 = vcmp.ne.s32.totalorder %v222, 4294967196
        %vm674 = vcmp.ne.s32.totalorder %v223, 4294967196
        %vm675 = vcmp.ne.s32.totalorder %v224, 4294967196
        %vm676 = vcmp.ne.s32.totalorder %v225, 4294967196
        %vm677 = vcmp.ne.s32.totalorder %v226, 4294967196
        %vm678 = vcmp.ne.s32.totalorder %v227, 4294967196
        %vm679 = vcmp.ne.s32.totalorder %v228, 4294967196
        %vm680 = vcmp.ne.s32.totalorder %v229, 4294967196
        %vm681 = vcmp.ne.s32.totalorder %v230, 4294967196
        %vm682 = vcmp.ne.s32.totalorder %v231, 4294967196
        %v683 = vsel %vm667, %v651, 0.0
        %v684 = vsel %vm668, %v652, 0.0
        %v685 = vsel %vm669, %v653, 0.0
        %v686 = vsel %vm670, %v654, 0.0
        %v687 = vsel %vm671, %v655, 0.0
        %v688 = vsel %vm672, %v656, 0.0
        %v689 = vsel %vm673, %v657, 0.0
        %v690 = vsel %vm674, %v658, 0.0
        %v691 = vsel %vm675, %v659, 0.0
        %v692 = vsel %vm676, %v660, 0.0
        %v693 = vsel %vm677, %v661, 0.0
        %v694 = vsel %vm678, %v662, 0.0
        %v695 = vsel %vm679, %v663, 0.0
        %v696 = vsel %vm680, %v664, 0.0
        %v697 = vsel %vm681, %v665, 0.0
        %v698 = vsel %vm682, %v666, 0.0
        %vm699 = vcmask 7168
        %v700 = vsel %vm699, %v683, 0.0
        %v701 = vsel %vm699, %v684, 0.0
        %v702 = vadd.f32 %v700, %v701
        %v703 = vsel %vm699, %v685, 0.0
        %v704 = vadd.f32 %v702, %v703
        %v705 = vsel %vm699, %v686, 0.0
        %v706 = vadd.f32 %v704, %v705
        %v707 = vsel %vm699, %v687, 0.0
        %v708 = vadd.f32 %v706, %v707
        %v709 = vsel %vm699, %v688, 0.0
        %v710 = vadd.f32 %v708, %v709
        %v711 = vsel %vm699, %v689, 0.0
        %v712 = vadd.f32 %v710, %v711
        %v713 = vsel %vm699, %v690, 0.0
        %v714 = vadd.f32 %v712, %v713
        %v715 = vsel %vm699, %v691, 0.0
        %v716 = vadd.f32 %v714, %v715
        %v717 = vsel %vm699, %v692, 0.0
        %v718 = vadd.f32 %v716, %v717
        %v719 = vsel %vm699, %v693, 0.0
        %v720 = vadd.f32 %v718, %v719
        %v721 = vsel %vm699, %v694, 0.0
        %v722 = vadd.f32 %v720, %v721
        %v723 = vsel %vm699, %v695, 0.0
        %v724 = vadd.f32 %v722, %v723
        %v725 = vsel %vm699, %v696, 0.0
        %v726 = vadd.f32 %v724, %v725
        %v727 = vsel %vm699, %v697, 0.0
        %v728 = vadd.f32 %v726, %v727
        %v729 = vsel %vm699, %v698, 0.0
        %v730 = vadd.f32 %v728, %v729
        %731 = vadd.xlane.f32.xlu0 %v730
        %v732 = vpop.xlane.xlu0 %731
        %v733 = vrot.slane %v732, 4
        %v734 = vadd.f32 %v732, %v733
        %v735 = vrot.slane %v734, 2
        %v736 = vadd.f32 %v734, %v735
        %v737 = vrot.slane %v736, 1
        %v738 = vadd.f32 %v736, %v737
        %s739 = vtos %v738
        %v740 = vsel %vm667, 1, 0
        %v741 = vsel %vm668, 1, 0
        %v742 = vsel %vm669, 1, 0
        %v743 = vsel %vm670, 1, 0
        %v744 = vsel %vm671, 1, 0
        %v745 = vsel %vm672, 1, 0
        %v746 = vsel %vm673, 1, 0
        %v747 = vsel %vm674, 1, 0
        %v748 = vsel %vm675, 1, 0
        %v749 = vsel %vm676, 1, 0
        %v750 = vsel %vm677, 1, 0
        %v751 = vsel %vm678, 1, 0
        %v752 = vsel %vm679, 1, 0
        %v753 = vsel %vm680, 1, 0
        %v754 = vsel %vm681, 1, 0
        %v755 = vsel %vm682, 1, 0
        %v756 = vcvt.s32.f32 %v740
        %v757 = vcvt.s32.f32 %v741
        %v758 = vcvt.s32.f32 %v742
        %v759 = vcvt.s32.f32 %v743
        %v760 = vcvt.s32.f32 %v744
        %v761 = vcvt.s32.f32 %v745
        %v762 = vcvt.s32.f32 %v746
        %v763 = vcvt.s32.f32 %v747
        %v764 = vcvt.s32.f32 %v748
        %v765 = vcvt.s32.f32 %v749
        %v766 = vcvt.s32.f32 %v750
        %v767 = vcvt.s32.f32 %v751
        %v768 = vcvt.s32.f32 %v752
        %v769 = vcvt.s32.f32 %v753
        %v770 = vcvt.s32.f32 %v754
        %v771 = vcvt.s32.f32 %v755
        %v772 = vsel %vm699, %v756, 0.0
        %v773 = vsel %vm699, %v757, 0.0
        %v774 = vadd.f32 %v772, %v773
        %v775 = vsel %vm699, %v758, 0.0
        %v776 = vadd.f32 %v774, %v775
        %v777 = vsel %vm699, %v759, 0.0
        %v778 = vadd.f32 %v776, %v777
        %v779 = vsel %vm699, %v760, 0.0
        %v780 = vadd.f32 %v778, %v779
        %v781 = vsel %vm699, %v761, 0.0
        %v782 = vadd.f32 %v780, %v781
        %v783 = vsel %vm699, %v762, 0.0
        %v784 = vadd.f32 %v782, %v783
        %v785 = vsel %vm699, %v763, 0.0
        %v786 = vadd.f32 %v784, %v785
        %v787 = vsel %vm699, %v764, 0.0
        %v788 = vadd.f32 %v786, %v787
        %v789 = vsel %vm699, %v765, 0.0
        %v790 = vadd.f32 %v788, %v789
        %v791 = vsel %vm699, %v766, 0.0
        %v792 = vadd.f32 %v790, %v791
        %v793 = vsel %vm699, %v767, 0.0
        %v794 = vadd.f32 %v792, %v793
        %v795 = vsel %vm699, %v768, 0.0
        %v796 = vadd.f32 %v794, %v795
        %v797 = vsel %vm699, %v769, 0.0
        %v798 = vadd.f32 %v796, %v797
        %v799 = vsel %vm699, %v770, 0.0
        %v800 = vadd.f32 %v798, %v799
        %v801 = vsel %vm699, %v771, 0.0
        %v802 = vadd.f32 %v800, %v801
        %803 = vadd.xlane.f32.xlu0 %v802
        %v804 = vpop.xlane.xlu0 %803
        %v805 = vrot.slane %v804, 4
        %v806 = vadd.f32 %v804, %v805
        %v807 = vrot.slane %v806, 2
        %v808 = vadd.f32 %v806, %v807
        %v809 = vrot.slane %v808, 1
        %v810 = vadd.f32 %v808, %v809
        %s811 = vtos %v810
        %v812 = vstv %s739
        %v813 = vstv %s811
        %v814 = vsel %vm699, %v812, %v813
        %vm815 = vcmask 8192
        %816 = vst.msk [vmem:[%s183] sm:$0x1] %vm815, %v814
        %p817 = scmp.lt.s32.totalorder %s16, 2
        %s818 = scalar_select %p817, %s16, 2
        %s819 = scalar_lea.vmem %s2, %s818
        // Predicated region
        $region33: #{tpu_custom_call.1} parent=27 // pred_check
          %p820 = pneg %p86
        $region34: #{tpu_custom_call.1} parent=27 // pred_check_branch
          %822 = sbr.rel (%p820) target = $region36
        $region35: #{tpu_custom_call.1} parent=27 // pred_region
          _
        $region36: #{tpu_custom_call.1} parent=27 // pred_fallthru
          _
      $region28: #{tpu_custom_call.1} parent=5 // pred_fallthru
        _
      %p823 = scmp.le.s32.totalorder 2, %s11
      // Predicated region
      $region37: #{tpu_custom_call.1} parent=5 // pred_check
        %p824 = pneg %p823
      $region38: #{tpu_custom_call.1} parent=5 // pred_check_branch
        %826 = sbr.rel (%p824) target = $region40
      $region39: #{tpu_custom_call.1} parent=5 // pred_region
        %s827 = ssub.s32 %s11, 2
        // Predicated region
        $region41: #{tpu_custom_call.1} parent=39 // pred_check
          %p828 = pneg %p92
        $region42: #{tpu_custom_call.1} parent=39 // pred_check_branch
          %830 = sbr.rel (%p828) target = $region44
        $region43: #{tpu_custom_call.1} parent=39 // pred_region
          %p831 = scmp.lt.s32.totalorder %s17, 2
          %s832 = scalar_select %p831, %s17, 2
          %s833 = scalar_lea.vmem %s2, %s832
        $region44: #{tpu_custom_call.1} parent=39 // pred_fallthru
          _
      $region40: #{tpu_custom_call.1} parent=5 // pred_fallthru
        _
    $region6: #{tpu_custom_call.1} parent=1 // loop_footer
      %s15 = sadd.s32 1, %s11
    $region7: #{tpu_custom_call.1} parent=1 // loop_footer_branch
      %10 = sbr.rel target = $region3
    $region8: #{tpu_custom_call.1} parent=1 // loop_exit
      _
    %834 = vsyncpa [#allocation3], 1
    %s835 = scalar_lea.sflag [#allocation3], 1
    %836 = vsyncpa %s835, 1

</llo_original>
